<compile_context>
chip_gen: v5e
topology: v5e:2x2
jax: 0.10.0
libtpu: 0.0.40
codegen_flags: <defaults>
</compile_context>

<pallas_src>
import functools

import jax
import jax.numpy as jnp
from jax.experimental import pallas as pl
from jax.experimental.pallas import tpu as pltpu


def _generator_kernel(x_ref, w_ref, b_ref, o_ref, m_sc, l_sc, *,
                      tile_n, n_vocab_tiles):
    # x_ref: (TM, d_model) bf16     w_ref: (d_model, TN) bf16   b_ref: (1, TN) f32
    # o_ref: (TM, vocab)   f32, resident across the (inner) vocab grid axis
    # m_sc / l_sc: (TM, 1) f32 running max / running sum-exp
    j = pl.program_id(1)

    @pl.when(j == 0)
    def _init():
        m_sc[...] = jnp.full(m_sc.shape, -jnp.inf, dtype=m_sc.dtype)
        l_sc[...] = jnp.zeros(l_sc.shape, dtype=l_sc.dtype)

    # MXU matmul with f32 accumulation; bias add and softmax math stay in f32.
    logits = jnp.dot(x_ref[...], w_ref[...], preferred_element_type=jnp.float32)
    logits = logits + b_ref[...]

    # Stage raw logits into the vocab-wide output slab (normalized at the end).
    if n_vocab_tiles == 1:
        o_ref[...] = logits
    else:
        col = pl.multiple_of(j * tile_n, tile_n)  # 128-aligned lane offset
        o_ref[:, pl.ds(col, tile_n)] = logits

    # Online logsumexp update (numerically stable, row-independent).
    m_prev = m_sc[...]
    m_new = jnp.maximum(m_prev, jnp.max(logits, axis=-1, keepdims=True))
    l_sc[...] = l_sc[...] * jnp.exp(m_prev - m_new) + jnp.sum(
        jnp.exp(logits - m_new), axis=-1, keepdims=True)
    m_sc[...] = m_new

    @pl.when(j == n_vocab_tiles - 1)
    def _finalize():
        lse = m_sc[...] + jnp.log(l_sc[...])
        o_ref[...] = (o_ref[...] - lse).astype(o_ref.dtype)


def _round_up(x, m):
    return ((x + m - 1) // m) * m


def _pick_tile_n(vocab, tile_n):
    """Largest multiple of 128 <= tile_n that divides vocab (else full vocab)."""
    if vocab <= tile_n or vocab % 128 != 0:
        return vocab
    t = (min(tile_n, vocab) // 128) * 128
    while t >= 128 and vocab % t != 0:
        t -= 128
    return t if t >= 128 else vocab


@functools.partial(jax.jit, static_argnames=("tile_m", "tile_n", "interpret"))
def generator_forward(x, w, b, tile_m=256, tile_n=2048, interpret=False):
    """log_softmax(x @ w + b, axis=-1).

    x: (batch, seq, d_model) f32; w: (d_model, vocab); b: (vocab,).
    tile_m: token-tile rows (128 is plenty on v5e; 256 fills the v6e/v7x MXU).
    tile_n: vocab-tile cols (kept a multiple of 128 dividing vocab).
    """
    batch, seq, d_model = x.shape
    d_model_w, vocab = w.shape
    assert d_model_w == d_model, "weight must be (d_model, vocab)"

    tokens = batch * seq
    tm = min(tile_m, _round_up(tokens, 8))
    tn = _pick_tile_n(vocab, tile_n)
    nv = vocab // tn
    nt = pl.cdiv(tokens, tm)

    # bf16 matmul inputs, f32 accumulation / bias / softmax.
    x2d = x.reshape(tokens, d_model).astype(jnp.bfloat16)
    w_bf = w.astype(jnp.bfloat16)
    b2d = b.reshape(1, vocab).astype(jnp.float32)

    # VMEM budget: double-buffered x/w/b tiles + double-buffered resident
    # output slab + tiny scratch, with slack.  Derived from the actual tiles so
    # it is valid on v5e/v6e (128 MiB) and v7x (64 MiB) alike.
    vmem_need = (2 * tm * d_model * 2        # x tile (bf16)
                 + 2 * d_model * tn * 2      # w tile (bf16)
                 + 2 * tn * 4                # bias tile (f32)
                 + 2 * tm * vocab * 4        # resident output slab (f32)
                 + 4 * tm * 4)               # m/l scratch
    vmem_limit = int(min(max(vmem_need + (4 << 20), 32 << 20), 100 << 20))

    kernel = functools.partial(_generator_kernel, tile_n=tn, n_vocab_tiles=nv)

    out2d = pl.pallas_call(
        kernel,
        out_shape=jax.ShapeDtypeStruct((tokens, vocab), jnp.float32),
        grid_spec=pltpu.PrefetchScalarGridSpec(
            num_scalar_prefetch=0,
            grid=(nt, nv),                       # tokens outer, vocab inner
            in_specs=[
                pl.BlockSpec((tm, d_model), lambda i, j: (i, 0)),
                pl.BlockSpec((d_model, tn), lambda i, j: (0, j)),
                pl.BlockSpec((1, tn), lambda i, j: (0, j)),
            ],
            out_specs=pl.BlockSpec((tm, vocab), lambda i, j: (i, 0)),
            scratch_shapes=[
                pltpu.VMEM((tm, 1), jnp.float32),   # running max
                pltpu.VMEM((tm, 1), jnp.float32),   # running sum-exp
            ],
        ),
        compiler_params=pltpu.CompilerParams(
            dimension_semantics=("parallel", "arbitrary"),
            vmem_limit_bytes=vmem_limit,
        ),
        interpret=interpret,
    )(x2d, w_bf, b2d)

    return out2d.reshape(batch, seq, vocab)


def _reference(x, w, b):
    logits = jnp.einsum("bsd,dv->bsv", x, w) + b
    return jax.nn.log_softmax(logits, axis=-1)


if __name__ == "__main__":
    # Small shapes implied by the module: d_model=32, vocab=128, batch=2, seq=8.
    batch, seq, d_model, vocab = 2, 8, 32, 128

    key = jax.random.PRNGKey(0)
    kx, kw, kb = jax.random.split(key, 3)

    x = jax.random.normal(kx, (batch, seq, d_model), dtype=jnp.float32)
    # PyTorch stores W as (vocab, d_model); we keep (d_model, vocab) for x @ W.
    bound = 1.0 / (d_model ** 0.5)
    w = jax.random.uniform(kw, (d_model, vocab), minval=-bound, maxval=bound,
                           dtype=jnp.float32)
    b = jax.random.uniform(kb, (vocab,), minval=-bound, maxval=bound,
                           dtype=jnp.float32)

    out = jax.block_until_ready(generator_forward(x, w, b))
    assert out.shape == (batch, seq, vocab)

    # Matmul runs in bf16 (f32 accumulation): compare (a) against a reference
    # fed the same bf16-rounded inputs (tight) and (b) the pure-f32 reference
    # (loose tolerance covering bf16 input rounding).
    x_bf = x.astype(jnp.bfloat16).astype(jnp.float32)
    w_bf = w.astype(jnp.bfloat16).astype(jnp.float32)
    assert jnp.allclose(out, _reference(x_bf, w_bf, b), atol=1e-3, rtol=1e-3), \
        "mismatch vs bf16-rounded reference"
    assert jnp.allclose(out, _reference(x, w, b), atol=5e-2, rtol=0.0), \
        "mismatch vs f32 reference"

    # Validate the general path (vocab tiling + partial token tile + online
    # logsumexp) at tiny shapes in interpret mode.
    b2, s2, d2, v2 = 2, 10, 32, 256
    k2x, k2w, k2b = jax.random.split(jax.random.PRNGKey(1), 3)
    x2 = jax.random.normal(k2x, (b2, s2, d2), dtype=jnp.float32)
    w2 = jax.random.uniform(k2w, (d2, v2), minval=-bound, maxval=bound,
                            dtype=jnp.float32)
    bv2 = jax.random.uniform(k2b, (v2,), minval=-bound, maxval=bound,
                             dtype=jnp.float32)
    out2 = jax.block_until_ready(
        generator_forward(x2, w2, bv2, tile_m=16, tile_n=128, interpret=True))
    ref2 = _reference(x2.astype(jnp.bfloat16).astype(jnp.float32),
                      w2.astype(jnp.bfloat16).astype(jnp.float32), bv2)
    assert jnp.allclose(out2, ref2, atol=1e-3, rtol=1e-3), \
        "mismatch on vocab-tiled path"

    print("KERNEL_OK")
</pallas_src>

<mosaic_0001>
module attributes {stable_mosaic.version = 11 : i64} {
  func.func @_generator_kernel(%arg0: i32, %arg1: i32, %arg2: memref<16x32xbf16, #tpu.memory_space<vmem>>, %arg3: memref<32x128xbf16, #tpu.memory_space<vmem>>, %arg4: memref<1x128xf32, #tpu.memory_space<vmem>>, %arg5: memref<16x128xf32, #tpu.memory_space<vmem>>, %arg6: memref<16x1xf32, #tpu.memory_space<vmem>>, %arg7: memref<16x1xf32, #tpu.memory_space<vmem>>) attributes {dimension_semantics = [#tpu.dimension_semantics<parallel>, #tpu.dimension_semantics<arbitrary>], iteration_bounds = array<i64: 1, 1>, scalar_prefetch = 0 : i64, scratch_operands = 2 : i64, tpu.core_type = #tpu.core_type<tc>, window_params = [{transform_indices = @transform_0, window_bounds = array<i64: 16, 32>}, {transform_indices = @transform_1, window_bounds = array<i64: 32, 128>}, {transform_indices = @transform_2, window_bounds = array<i64: 1, 128>}, {transform_indices = @transform_3, window_bounds = array<i64: 16, 128>}]} {
    %c0_i32 = arith.constant 0 : i32
    %0 = arith.cmpi eq, %arg1, %c0_i32 : i32
    %1 = arith.extui %0 : i1 to i32
    %c0_i32_0 = arith.constant 0 : i32
    %2 = arith.cmpi ne, %1, %c0_i32_0 : i32
    scf.if %2 {
      %cst_20 = arith.constant 0xFF800000 : f32
      %29 = vector.broadcast %cst_20 : f32 to vector<16x1xf32>
      %c0_21 = arith.constant 0 : index
      %c0_22 = arith.constant 0 : index
      %30 = vector.load %arg6[%c0_21, %c0_22] : memref<16x1xf32, #tpu.memory_space<vmem>>, vector<16x1xf32>
      tpu.vector_store %arg6[%c0_21, %c0_22], %29 {strides = array<i32>} : memref<16x1xf32, #tpu.memory_space<vmem>>, vector<16x1xf32>,
      %cst_23 = arith.constant 0.000000e+00 : f32
      %31 = vector.broadcast %cst_23 : f32 to vector<16x1xf32>
      %c0_24 = arith.constant 0 : index
      %c0_25 = arith.constant 0 : index
      %32 = vector.load %arg7[%c0_24, %c0_25] : memref<16x1xf32, #tpu.memory_space<vmem>>, vector<16x1xf32>
      tpu.vector_store %arg7[%c0_24, %c0_25], %31 {strides = array<i32>} : memref<16x1xf32, #tpu.memory_space<vmem>>, vector<16x1xf32>,
    } else {
    }
    %c0 = arith.constant 0 : index
    %c0_1 = arith.constant 0 : index
    %3 = vector.load %arg2[%c0, %c0_1] : memref<16x32xbf16, #tpu.memory_space<vmem>>, vector<16x32xbf16>
    %c0_2 = arith.constant 0 : index
    %c0_3 = arith.constant 0 : index
    %4 = vector.load %arg3[%c0_2, %c0_3] : memref<32x128xbf16, #tpu.memory_space<vmem>>, vector<32x128xbf16>
    %cst = arith.constant dense<0.000000e+00> : vector<16x128xf32>
    %5 = tpu.matmul %3, %4, %cst {dimension_numbers = #tpu.dot_dimension_numbers<[1], [0], [0], [1], [0, 0, 1, 1], [], []>} : vector<16x32xbf16>, vector<32x128xbf16>, vector<16x128xf32> -> vector<16x128xf32>
    %c0_4 = arith.constant 0 : index
    %c0_5 = arith.constant 0 : index
    %6 = vector.load %arg4[%c0_4, %c0_5] : memref<1x128xf32, #tpu.memory_space<vmem>>, vector<1x128xf32>
    %7 = vector.broadcast %6 : vector<1x128xf32> to vector<16x128xf32>
    %8 = arith.addf %5, %7 : vector<16x128xf32>
    %c0_6 = arith.constant 0 : index
    %c0_7 = arith.constant 0 : index
    %9 = vector.load %arg5[%c0_6, %c0_7] : memref<16x128xf32, #tpu.memory_space<vmem>>, vector<16x128xf32>
    tpu.vector_store %arg5[%c0_6, %c0_7], %8 {strides = array<i32>} : memref<16x128xf32, #tpu.memory_space<vmem>>, vector<16x128xf32>,
    %c0_8 = arith.constant 0 : index
    %c0_9 = arith.constant 0 : index
    %10 = vector.load %arg6[%c0_8, %c0_9] : memref<16x1xf32, #tpu.memory_space<vmem>>, vector<16x1xf32>
    %cst_10 = arith.constant dense<0xFF800000> : vector<16xf32>
    %11 = vector.multi_reduction <maximumf>, %8, %cst_10 [1] : vector<16x128xf32> to vector<16xf32>
    %12 = vector.shape_cast %11 : vector<16xf32> to vector<16x1xf32>
    %13 = arith.maximumf %10, %12 : vector<16x1xf32>
    %c0_11 = arith.constant 0 : index
    %c0_12 = arith.constant 0 : index
    %14 = vector.load %arg7[%c0_11, %c0_12] : memref<16x1xf32, #tpu.memory_space<vmem>>, vector<16x1xf32>
    %15 = arith.subf %10, %13 : vector<16x1xf32>
    %16 = math.exp %15 : vector<16x1xf32>
    %17 = arith.mulf %14, %16 : vector<16x1xf32>
    %18 = vector.broadcast %13 : vector<16x1xf32> to vector<16x128xf32>
    %19 = arith.subf %8, %18 : vector<16x128xf32>
    %20 = math.exp %19 : vector<16x128xf32>
    %cst_13 = arith.constant dense<0.000000e+00> : vector<16xf32>
    %21 = vector.multi_reduction <add>, %20, %cst_13 [1] : vector<16x128xf32> to vector<16xf32>
    %22 = vector.shape_cast %21 : vector<16xf32> to vector<16x1xf32>
    %23 = arith.addf %17, %22 : vector<16x1xf32>
    %c0_14 = arith.constant 0 : index
    %c0_15 = arith.constant 0 : index
    %24 = vector.load %arg7[%c0_14, %c0_15] : memref<16x1xf32, #tpu.memory_space<vmem>>, vector<16x1xf32>
    tpu.vector_store %arg7[%c0_14, %c0_15], %23 {strides = array<i32>} : memref<16x1xf32, #tpu.memory_space<vmem>>, vector<16x1xf32>,
    %c0_16 = arith.constant 0 : index
    %c0_17 = arith.constant 0 : index
    %25 = vector.load %arg6[%c0_16, %c0_17] : memref<16x1xf32, #tpu.memory_space<vmem>>, vector<16x1xf32>
    tpu.vector_store %arg6[%c0_16, %c0_17], %13 {strides = array<i32>} : memref<16x1xf32, #tpu.memory_space<vmem>>, vector<16x1xf32>,
    %c0_i32_18 = arith.constant 0 : i32
    %26 = arith.cmpi eq, %arg1, %c0_i32_18 : i32
    %27 = arith.extui %26 : i1 to i32
    %c0_i32_19 = arith.constant 0 : i32
    %28 = arith.cmpi ne, %27, %c0_i32_19 : i32
    scf.if %28 {
      %c0_20 = arith.constant 0 : index
      %c0_21 = arith.constant 0 : index
      %29 = vector.load %arg6[%c0_20, %c0_21] : memref<16x1xf32, #tpu.memory_space<vmem>>, vector<16x1xf32>
      %c0_22 = arith.constant 0 : index
      %c0_23 = arith.constant 0 : index
      %30 = vector.load %arg7[%c0_22, %c0_23] : memref<16x1xf32, #tpu.memory_space<vmem>>, vector<16x1xf32>
      %31 = math.log %30 : vector<16x1xf32>
      %32 = arith.addf %29, %31 : vector<16x1xf32>
      %c0_24 = arith.constant 0 : index
      %c0_25 = arith.constant 0 : index
      %33 = vector.load %arg5[%c0_24, %c0_25] : memref<16x128xf32, #tpu.memory_space<vmem>>, vector<16x128xf32>
      %34 = vector.broadcast %32 : vector<16x1xf32> to vector<16x128xf32>
      %35 = arith.subf %33, %34 : vector<16x128xf32>
      %c0_26 = arith.constant 0 : index
      %c0_27 = arith.constant 0 : index
      %36 = vector.load %arg5[%c0_26, %c0_27] : memref<16x128xf32, #tpu.memory_space<vmem>>, vector<16x128xf32>
      tpu.vector_store %arg5[%c0_26, %c0_27], %35 {strides = array<i32>} : memref<16x128xf32, #tpu.memory_space<vmem>>, vector<16x128xf32>,
    } else {
    }
    return
  }
  func.func @transform_0(%arg0: i32, %arg1: i32) -> (i32, i32) {
    %c0_i32 = arith.constant 0 : i32
    %c0_i32_0 = arith.constant 0 : i32
    return %arg0, %c0_i32 : i32, i32
  }
  func.func @transform_1(%arg0: i32, %arg1: i32) -> (i32, i32) {
    %c0_i32 = arith.constant 0 : i32
    %c0_i32_0 = arith.constant 0 : i32
    return %c0_i32, %arg1 : i32, i32
  }
  func.func @transform_2(%arg0: i32, %arg1: i32) -> (i32, i32) {
    %c0_i32 = arith.constant 0 : i32
    %c0_i32_0 = arith.constant 0 : i32
    return %c0_i32, %arg1 : i32, i32
  }
  func.func @transform_3(%arg0: i32, %arg1: i32) -> (i32, i32) {
    %c0_i32 = arith.constant 0 : i32
    %c0_i32_0 = arith.constant 0 : i32
    return %arg0, %c0_i32 : i32, i32
  }
}

</mosaic_0001>

<llo_original>
// kernel: generator_forward.1
$region0: #{generator_forward.1}
  #allocation0 [shape = 'u32[]', space=smem, size = 0x4, offset = 0x4, fixed_abs, tag = 'smem constant byte address 0x4 - core index']
  #allocation1 [shape = 'u32[72,128]{1,0:T(1,128)}', space=vmem, size = 0x9000, scoped, tag = 'internal scratch']
  #allocation2 [shape = 'f32[16,1]{1,0:T(8,128)}', space=vmem, size = 0x2000, scoped, tag = 'scratch operand']
  #allocation3 [shape = 'f32[16,1]{1,0:T(8,128)}', space=vmem, size = 0x2000, scoped, tag = 'scratch operand']
  %s0 = inlined_call_operand.vmem [shape: bf16[16,32], index: 0, kind: input, shape index: {}]
  %s1 = inlined_call_operand.vmem [shape: bf16[32,128], index: 1, kind: input, shape index: {}]
  %s2 = inlined_call_operand.vmem [shape: f32[1,128], index: 2, kind: input, shape index: {}]
  %s3 = inlined_call_operand.hbm [shape: f32[16,128], index: 3, kind: output, shape index: {}]
  %s4 = sld [smem:[#allocation0]]
  $region30: #{generator_forward.1} parent=0
    _
  %s6 = ssub.s32 1, %s4
  %s7 = scalar_select 0, %s6, %s4
  $region1: #{generator_forward.1} parent=0
    #allocation4 [shape = 'u8[8192]{0}', space=vmem, size = 0x2000, scoped, tag = 'output window, operand 0, single buffered']
    #allocation5 [shape = 's32[1]{0}', space=sflag, size = 0x4, scoped, tag = 'scoped memory for generator_forward.1']
    %8 = vsyncpa [#allocation5], 0
    // Predicated region
    $region2: #{generator_forward.1} parent=1 // pred_check
      _
    $region3: #{generator_forward.1} parent=1 // pred_check_branch
      %10 = sbr.rel (0) target = $region5
    $region4: #{generator_forward.1} parent=1 // pred_region
      _
    $region5: #{generator_forward.1} parent=1 // pred_fallthru
      _
    // Predicated region
    $region6: #{generator_forward.1} parent=1 // pred_check
      _
    $region7: #{generator_forward.1} parent=1 // pred_check_branch
      %12 = sbr.rel (0) target = $region9
    $region8: #{generator_forward.1} parent=1 // pred_region
      _
    $region9: #{generator_forward.1} parent=1 // pred_fallthru
      _
    // Predicated region
    $region10: #{generator_forward.1} parent=1 // pred_check
      _
    $region11: #{generator_forward.1} parent=1 // pred_check_branch
      %14 = sbr.rel (0) target = $region13
    $region12: #{generator_forward.1} parent=1 // pred_region
      _
    $region13: #{generator_forward.1} parent=1 // pred_fallthru
      _
    %p16 = scmp.eq.s32.totalorder 0, 0
    // Predicated region
    $region14: #{generator_forward.1} parent=1 // pred_check
      %p17 = pneg %p16
    $region15: #{generator_forward.1} parent=1 // pred_check_branch
      %19 = sbr.rel (%p17) target = $region17
    $region16: #{generator_forward.1} parent=1 // pred_region
      %vm20 = vcmask 7168
      %21 = vst.msk [vmem:[#allocation2] sm:$0xff] %vm20, -inf
      %22 = vst.msk [vmem:[#allocation2 + $0x8] sm:$0xff] %vm20, -inf
      %23 = vst.msk [vmem:[#allocation3] sm:$0xff] %vm20, 0.0
      %24 = vst.msk [vmem:[#allocation3 + $0x8] sm:$0xff] %vm20, 0.0
    $region17: #{generator_forward.1} parent=1 // pred_fallthru
      _
    %v25 = vld [vmem:[%s0] sm:$0xf]
    %v26 = vld [vmem:[%s0 + $0x4] sm:$0xf]
    %v27 = vld [vmem:[%s1] sm:$0xf]
    %v28 = vld [vmem:[%s1 + $0x4] sm:$0xf]
    %v29 = vld [vmem:[%s1 + $0x8] sm:$0xf]
    %v30 = vld [vmem:[%s1 + $0xc] sm:$0xf]
    %v31 = vld [vmem:[%s2] sm:$0x1]
    %v33 = vperm.slane %v31, 0
    %v37 = vunpack.c.l.b16 %v25
    %v38 = vunpack.c.l.b16 %v26
    %v39 = vpack.c.b16 %v38, %v37
    %v44 = vunpack.c.l.b16 %v27
    %v45 = vunpack.c.l.b16 %v28
    %v46 = vunpack.c.l.b16 %v29
    %v47 = vunpack.c.l.b16 %v30
    %v48 = vpack.c.b16 %v45, %v44
    %v49 = vpack.c.b16 %v47, %v46
    %vm52 = vcmask 261120
    %v54 = vsel %vm52, %v39, 0
    %56 = vmatpush.bf16.msra.mxu0 0
    %57 = vmatpush.bf16.msra.mxu0 0
    %58 = vmatpush.bf16.msra.mxu0 0
    %59 = vmatpush.bf16.msra.mxu0 0
    %60 = vmatpush.bf16.msra.mxu0 0
    %61 = vmatpush.bf16.msra.mxu0 0
    %62 = vmatpush.bf16.msra.mxu0 %v49
    %63 = vmatpush.bf16.msra.mxu0 %v48
    %64 = vmatmul.bf16.gmra.mxu0 %v54
    %v65 = vpop.f32.mrf.mxu0
    %v66 = vadd.f32 %v33, %v65
    %v67 = vpop.f32.mrf.mxu0
    %v68 = vadd.f32 %v33, %v67
    %69 = vdwg.mxu0
    %70 = vst [vmem:[#allocation4] sm:$0xff] %v66
    %71 = vst [vmem:[#allocation4 + $0x8] sm:$0xff] %v68
    %v72 = vld [vmem:[#allocation2] sm:$0xff]
    %v73 = vld [vmem:[#allocation2 + $0x8] sm:$0xff]
    %74 = vmax.xlane.f32.xlu0 %v66
    %v75 = vpop.xlane.xlu0 %74
    %76 = vmax.xlane.f32.xlu0 %v68
    %v77 = vpop.xlane.xlu0 %76
    %v78 = vmax.f32 %v72, %v75
    %v79 = vmax.f32 %v73, %v77
    %v80 = vld [vmem:[#allocation3] sm:$0xff]
    %v81 = vld [vmem:[#allocation3 + $0x8] sm:$0xff]
    %v82 = vsub.f32 %v72, %v78
    %v83 = vsub.f32 %v73, %v79
    %v84 = vmul.f32 %v82, 1.442695
    %v85 = vpow.pop %v84
    %v86 = vmul.f32 %v83, 1.442695
    %v87 = vpow.pop %v86
    %v88 = vmul.f32 %v80, %v85
    %v89 = vmul.f32 %v81, %v87
    %91 = vset.pattern.permute.xlu0 0
    %92 = vperm.xlu0 %91, %v78
    %v93 = vpop.permute.xlu0 %92
    %96 = vset.pattern.permute.xlu0 0
    %97 = vperm.xlu0 %96, %v79
    %v98 = vpop.permute.xlu0 %97
    %v100 = vsub.f32 %v66, %v93
    %v101 = vsub.f32 %v68, %v98
    %v102 = vmul.f32 %v100, 1.442695
    %v103 = vpow.pop %v102
    %v104 = vmul.f32 %v101, 1.442695
    %v105 = vpow.pop %v104
    %106 = vadd.xlane.f32.xlu0 %v103
    %v107 = vpop.xlane.xlu0 %106
    %108 = vadd.xlane.f32.xlu0 %v105
    %v109 = vpop.xlane.xlu0 %108
    %v110 = vadd.f32 %v88, %v107
    %v111 = vadd.f32 %v89, %v109
    %vm112 = vcmask 7168
    %113 = vst.msk [vmem:[#allocation3] sm:$0xff] %vm112, %v110
    %114 = vst.msk [vmem:[#allocation3 + $0x8] sm:$0xff] %vm112, %v111
    %115 = vst.msk [vmem:[#allocation2] sm:$0xff] %vm112, %v78
    %116 = vst.msk [vmem:[#allocation2 + $0x8] sm:$0xff] %vm112, %v79
    // Predicated region
    $region18: #{generator_forward.1} parent=1 // pred_check
      %p117 = pneg %p16
    $region19: #{generator_forward.1} parent=1 // pred_check_branch
      %119 = sbr.rel (%p117) target = $region21
    $region20: #{generator_forward.1} parent=1 // pred_region
      %v120 = vld [vmem:[#allocation2] sm:$0xff]
      %v121 = vld [vmem:[#allocation2 + $0x8] sm:$0xff]
      %v122 = vld [vmem:[#allocation3] sm:$0xff]
      %v123 = vld [vmem:[#allocation3 + $0x8] sm:$0xff]
      %v124 = vlog2.pop %v122
      %v125 = vmul.f32 %v124, 0.6931472
      %v126 = vlog2.pop %v123
      %v127 = vmul.f32 %v126, 0.6931472
      %v128 = vadd.f32 %v120, %v125
      %v129 = vadd.f32 %v121, %v127
      %v130 = vld [vmem:[#allocation4] sm:$0xff]
      %v131 = vld [vmem:[#allocation4 + $0x8] sm:$0xff]
      %133 = vset.pattern.permute.xlu0 0
      %134 = vperm.xlu0 %133, %v128
      %v135 = vpop.permute.xlu0 %134
      %138 = vset.pattern.permute.xlu0 0
      %139 = vperm.xlu0 %138, %v129
      %v140 = vpop.permute.xlu0 %139
      %v142 = vsub.f32 %v130, %v135
      %v143 = vsub.f32 %v131, %v140
      %144 = vst [vmem:[#allocation4] sm:$0xff] %v142
      %145 = vst [vmem:[#allocation4 + $0x8] sm:$0xff] %v143
    $region21: #{generator_forward.1} parent=1 // pred_fallthru
      _
    // Predicated region
    $region22: #{generator_forward.1} parent=1 // pred_check
      _
    $region23: #{generator_forward.1} parent=1 // pred_check_branch
      %147 = sbr.rel (0) target = $region25
    $region24: #{generator_forward.1} parent=1 // pred_region
      %149 = vsyncadd [#allocation5], 0
      %s150 = sshll.u32 [#allocation4], 4
      %s151 = int_to_ptr.vmem [resolvable:$true] %s150
      %s152 = sshll.u32 %s3, 4
      %s153 = int_to_ptr.hbm [resolvable:$true] %s152
      %158 = dma.vmem_to_hbm [thread:$0]  %s151, 256, %s153, [#allocation5], 128, 128, 8
    $region25: #{generator_forward.1} parent=1 // pred_fallthru
      _
    // Predicated region
    $region26: #{generator_forward.1} parent=1 // pred_check
      _
    $region27: #{generator_forward.1} parent=1 // pred_check_branch
      %160 = sbr.rel (0) target = $region29
    $region28: #{generator_forward.1} parent=1 // pred_region
      %162 = dma.done [#allocation5], 256
    $region29: #{generator_forward.1} parent=1 // pred_fallthru
      _
    %163 = vsyncpa [#allocation5], 1

</llo_original>
